<compile_context>
chip_gen: v6e
topology: v6e:2x2x1
jax: 0.10.0
libtpu: 0.0.40
codegen_flags: <defaults>
</compile_context>

<pallas_src>
import functools

import jax
import jax.numpy as jnp
from jax.experimental import pallas as pl
from jax.experimental.pallas import tpu as pltpu


def _round_up(x, m):
    return ((x + m - 1) // m) * m


def _linear_kernel(x_ref, wt_ref, b_ref, o_ref):
    # x_ref : (TM, D_pad)   activation row tile
    # wt_ref: (D_pad, C_pad) pre-transposed, lane-padded classifier weight
    # b_ref : (1, C_pad)    lane-padded bias
    # o_ref : (TM, C_pad)   logits tile
    acc = jnp.dot(x_ref[...], wt_ref[...], preferred_element_type=jnp.float32)  # MXU
    o_ref[...] = (acc + b_ref[...]).astype(o_ref.dtype)


def prepare_classifier_params(w_cls, b_cls):
    """One-time prep (hoisted out of the per-call path).

    w_cls: (C, D) PyTorch nn.Linear weight; b_cls: (C,).
    Returns (wt_pad (D_pad, C_pad), b_pad (1, C_pad)).
    """
    C, D = w_cls.shape
    D_pad = _round_up(D, 128)
    C_pad = _round_up(C, 128)
    wt = jnp.pad(w_cls.T, ((0, D_pad - D), (0, C_pad - C)))        # (D_pad, C_pad)
    b = jnp.pad(b_cls, (0, C_pad - C)).reshape(1, C_pad)           # (1, C_pad)
    return wt, b


def _choose_tm(M, d_pad, c_pad, itemsize, budget_bytes=40 * 1024 * 1024):
    """Pick the row-tile size: <=512, multiple of 8, within the VMEM budget
    (2x double-buffered x tile + 2x out tile + resident weight/bias)."""
    resident = (d_pad * c_pad + c_pad) * itemsize
    per_row = 2 * (d_pad + c_pad) * itemsize
    cap = max(8, (budget_bytes - resident) // max(per_row, 1))
    tm = min(512, _round_up(M, 8), cap)
    return max(8, (tm // 8) * 8)


def semantic_decoder_avvp_forward(input_vq, wt_pad, b_pad, class_num):
    """input_vq: (..., D) f32; wt_pad: (D_pad, C_pad); b_pad: (1, C_pad).
    Returns class logits (..., class_num)."""
    *lead, D = input_vq.shape
    D_pad, C_pad = wt_pad.shape
    x2d = input_vq.reshape(-1, D)
    M = x2d.shape[0]

    itemsize = jnp.dtype(input_vq.dtype).itemsize
    TM = _choose_tm(M, D_pad, C_pad, itemsize)
    M_pad = _round_up(M, TM)

    if (M_pad != M) or (D_pad != D):
        x2d = jnp.pad(x2d, ((0, M_pad - M), (0, D_pad - D)))

    out = pl.pallas_call(
        _linear_kernel,
        out_shape=jax.ShapeDtypeStruct((M_pad, C_pad), input_vq.dtype),
        grid_spec=pltpu.PrefetchScalarGridSpec(
            num_scalar_prefetch=0,
            grid=(M_pad // TM,),
            in_specs=[
                pl.BlockSpec((TM, D_pad), lambda i: (i, 0)),       # row tile (pipelined)
                pl.BlockSpec((D_pad, C_pad), lambda i: (0, 0)),    # weight, VMEM-resident
                pl.BlockSpec((1, C_pad), lambda i: (0, 0)),        # bias, VMEM-resident
            ],
            out_specs=pl.BlockSpec((TM, C_pad), lambda i: (i, 0)),
        ),
        compiler_params=pltpu.CompilerParams(
            dimension_semantics=("parallel",),                     # megacore on v7x
            vmem_limit_bytes=48 * 1024 * 1024,
        ),
    )(x2d, wt_pad, b_pad)

    out = out[:M, :class_num]
    return out.reshape(*lead, class_num)


def init_params(key, input_dim, class_num):
    """Deterministic synthetic init matching nn.Linear parameter shapes."""
    k1, k2, k3, k4 = jax.random.split(key, 4)
    bound = 1.0 / (input_dim ** 0.5)
    # self.linear (unused in forward, kept for parameter-shape fidelity)
    w_lin = jax.random.uniform(k1, (input_dim, input_dim), jnp.float32, -bound, bound)
    b_lin = jax.random.uniform(k2, (input_dim,), jnp.float32, -bound, bound)
    # self.event_classifier : Linear(input_dim, class_num)
    w_cls = jax.random.uniform(k3, (class_num, input_dim), jnp.float32, -bound, bound)
    b_cls = jax.random.uniform(k4, (class_num,), jnp.float32, -bound, bound)
    return {"w_lin": w_lin, "b_lin": b_lin, "w_cls": w_cls, "b_cls": b_cls}


if __name__ == "__main__":
    key = jax.random.PRNGKey(0)
    batch, seq, input_dim, class_num = 2, 8, 32, 16

    k_in, k_par = jax.random.split(key)
    input_vq = jax.random.normal(k_in, (batch, seq, input_dim), jnp.float32)
    params = init_params(k_par, input_dim, class_num)

    # Hoisted, one-time weight transpose + lane padding.
    wt_pad, b_pad = prepare_classifier_params(params["w_cls"], params["b_cls"])

    fwd = jax.jit(functools.partial(semantic_decoder_avvp_forward, class_num=class_num))
    logits = jax.block_until_ready(fwd(input_vq, wt_pad, b_pad))

    # Reference check in plain JAX (same math as torch.nn.Linear forward).
    ref = input_vq @ params["w_cls"].T + params["b_cls"]
    assert logits.shape == (batch, seq, class_num)
    assert jnp.allclose(logits, ref, atol=1e-5, rtol=1e-5)

    print("KERNEL_OK")
</pallas_src>

<mosaic_0001>
module attributes {stable_mosaic.version = 11 : i64} {
  func.func @_linear_kernel(%arg0: i32, %arg1: memref<16x128xf32, #tpu.memory_space<vmem>>, %arg2: memref<128x128xf32, #tpu.memory_space<vmem>>, %arg3: memref<1x128xf32, #tpu.memory_space<vmem>>, %arg4: memref<16x128xf32, #tpu.memory_space<vmem>>) attributes {dimension_semantics = [#tpu.dimension_semantics<parallel>], iteration_bounds = array<i64: 1>, scalar_prefetch = 0 : i64, scratch_operands = 0 : i64, tpu.core_type = #tpu.core_type<tc>, window_params = [{transform_indices = @transform_0, window_bounds = array<i64: 16, 128>}, {pipeline_mode = #tpu.pipeline_mode<synchronous>, transform_indices = @transform_1, window_bounds = array<i64: 128, 128>}, {pipeline_mode = #tpu.pipeline_mode<synchronous>, transform_indices = @transform_2, window_bounds = array<i64: 1, 128>}, {transform_indices = @transform_3, window_bounds = array<i64: 16, 128>}]} {
    %c0 = arith.constant 0 : index
    %c0_0 = arith.constant 0 : index
    %0 = vector.load %arg1[%c0, %c0_0] : memref<16x128xf32, #tpu.memory_space<vmem>>, vector<16x128xf32>
    %c0_1 = arith.constant 0 : index
    %c0_2 = arith.constant 0 : index
    %1 = vector.load %arg2[%c0_1, %c0_2] : memref<128x128xf32, #tpu.memory_space<vmem>>, vector<128x128xf32>
    %cst = arith.constant dense<0.000000e+00> : vector<16x128xf32>
    %2 = tpu.matmul %0, %1, %cst {dimension_numbers = #tpu.dot_dimension_numbers<[1], [0], [0], [1], [0, 0, 1, 1], [], []>} : vector<16x128xf32>, vector<128x128xf32>, vector<16x128xf32> -> vector<16x128xf32>
    %c0_3 = arith.constant 0 : index
    %c0_4 = arith.constant 0 : index
    %3 = vector.load %arg3[%c0_3, %c0_4] : memref<1x128xf32, #tpu.memory_space<vmem>>, vector<1x128xf32>
    %4 = vector.broadcast %3 : vector<1x128xf32> to vector<16x128xf32>
    %5 = arith.addf %2, %4 : vector<16x128xf32>
    %c0_5 = arith.constant 0 : index
    %c0_6 = arith.constant 0 : index
    %6 = vector.load %arg4[%c0_5, %c0_6] : memref<16x128xf32, #tpu.memory_space<vmem>>, vector<16x128xf32>
    tpu.vector_store %arg4[%c0_5, %c0_6], %5 {strides = array<i32>} : memref<16x128xf32, #tpu.memory_space<vmem>>, vector<16x128xf32>,
    return
  }
  func.func @transform_0(%arg0: i32) -> (i32, i32) {
    %c0_i32 = arith.constant 0 : i32
    %c0_i32_0 = arith.constant 0 : i32
    return %arg0, %c0_i32 : i32, i32
  }
  func.func @transform_1(%arg0: i32) -> (i32, i32) {
    %c0_i32 = arith.constant 0 : i32
    %c0_i32_0 = arith.constant 0 : i32
    %c0_i32_1 = arith.constant 0 : i32
    return %c0_i32, %c0_i32_0 : i32, i32
  }
  func.func @transform_2(%arg0: i32) -> (i32, i32) {
    %c0_i32 = arith.constant 0 : i32
    %c0_i32_0 = arith.constant 0 : i32
    %c0_i32_1 = arith.constant 0 : i32
    return %c0_i32, %c0_i32_0 : i32, i32
  }
  func.func @transform_3(%arg0: i32) -> (i32, i32) {
    %c0_i32 = arith.constant 0 : i32
    %c0_i32_0 = arith.constant 0 : i32
    return %arg0, %c0_i32 : i32, i32
  }
}

</mosaic_0001>

<llo_original>
// kernel: semantic_decoder_avvp_forward.1
$region0: #{semantic_decoder_avvp_forward.1}
  #allocation0 [shape = 'u32[]', space=smem, size = 0x4, offset = 0x4, fixed_abs, tag = 'smem constant byte address 0x4 - core index']
  #allocation1 [shape = 'u32[144,128]{1,0:T(1,128)}', space=vmem, size = 0x12000, scoped, tag = 'internal scratch']
  %s0 = inlined_call_operand.vmem [shape: f32[16,128], index: 0, kind: input, shape index: {}]
  %s1 = inlined_call_operand.hbm [shape: f32[128,128], index: 1, kind: input, shape index: {}]
  %s2 = inlined_call_operand.vmem [shape: f32[1,128], index: 2, kind: input, shape index: {}]
  %s3 = inlined_call_operand.vmem [shape: f32[16,128], index: 3, kind: output, shape index: {}]
  %s4 = sld [smem:[#allocation0]]
  $region26: #{semantic_decoder_avvp_forward.1} parent=0
    _
  %s6 = ssub.s32 1, %s4
  %s7 = scalar_select 0, %s6, %s4
  $region1: #{semantic_decoder_avvp_forward.1} parent=0
    #allocation2 [shape = 'u8[65536]{0}', space=vmem, size = 0x10000, scoped, tag = 'input window, operand 1, single buffered']
    #allocation3 [shape = 's32[1]{0}', space=sflag, size = 0x4, scoped, tag = 'scoped memory for semantic_decoder_avvp_forward.1']
    %8 = vsyncpa [#allocation3], 0
    // Predicated region
    $region2: #{semantic_decoder_avvp_forward.1} parent=1 // pred_check
      _
    $region3: #{semantic_decoder_avvp_forward.1} parent=1 // pred_check_branch
      %10 = sbr.rel (0) target = $region5
    $region4: #{semantic_decoder_avvp_forward.1} parent=1 // pred_region
      _
    $region5: #{semantic_decoder_avvp_forward.1} parent=1 // pred_fallthru
      _
    // Predicated region
    $region6: #{semantic_decoder_avvp_forward.1} parent=1 // pred_check
      _
    $region7: #{semantic_decoder_avvp_forward.1} parent=1 // pred_check_branch
      %12 = sbr.rel (0) target = $region9
    $region8: #{semantic_decoder_avvp_forward.1} parent=1 // pred_region
      %s14 = ssub.s32 2048, 2048
      %15 = vsyncadd [#allocation3], %s14
      %s16 = sshll.u32 [#allocation2], 4
      %s17 = int_to_ptr.vmem [resolvable:$true] %s16
      %22 = dma.hbm_to_vmem [thread:$0]  %s1, 2048, %s17, [#allocation3], 128, 128, 8
    $region9: #{semantic_decoder_avvp_forward.1} parent=1 // pred_fallthru
      _
    // Predicated region
    $region10: #{semantic_decoder_avvp_forward.1} parent=1 // pred_check
      _
    $region11: #{semantic_decoder_avvp_forward.1} parent=1 // pred_check_branch
      %24 = sbr.rel (0) target = $region13
    $region12: #{semantic_decoder_avvp_forward.1} parent=1 // pred_region
      _
    $region13: #{semantic_decoder_avvp_forward.1} parent=1 // pred_fallthru
      _
    // Predicated region
    $region14: #{semantic_decoder_avvp_forward.1} parent=1 // pred_check
      _
    $region15: #{semantic_decoder_avvp_forward.1} parent=1 // pred_check_branch
      %26 = sbr.rel (0) target = $region17
    $region16: #{semantic_decoder_avvp_forward.1} parent=1 // pred_region
      %27 = dma.done [#allocation3], 2048
    $region17: #{semantic_decoder_avvp_forward.1} parent=1 // pred_fallthru
      _
    %v28 = vld [vmem:[%s0] sm:$0xff]
    %v29 = vld [vmem:[%s0 + $0x8] sm:$0xff]
    %v30 = vld [vmem:[#allocation2] sm:$0xff]
    %v31 = vld [vmem:[#allocation2 + $0x8] sm:$0xff]
    %v32 = vld [vmem:[#allocation2 + $0x10] sm:$0xff]
    %v33 = vld [vmem:[#allocation2 + $0x18] sm:$0xff]
    %v34 = vld [vmem:[#allocation2 + $0x20] sm:$0xff]
    %v35 = vld [vmem:[#allocation2 + $0x28] sm:$0xff]
    %v36 = vld [vmem:[#allocation2 + $0x30] sm:$0xff]
    %v37 = vld [vmem:[#allocation2 + $0x38] sm:$0xff]
    %v38 = vld [vmem:[#allocation2 + $0x40] sm:$0xff]
    %v39 = vld [vmem:[#allocation2 + $0x48] sm:$0xff]
    %v40 = vld [vmem:[#allocation2 + $0x50] sm:$0xff]
    %v41 = vld [vmem:[#allocation2 + $0x58] sm:$0xff]
    %v42 = vld [vmem:[#allocation2 + $0x60] sm:$0xff]
    %v43 = vld [vmem:[#allocation2 + $0x68] sm:$0xff]
    %v44 = vld [vmem:[#allocation2 + $0x70] sm:$0xff]
    %v45 = vld [vmem:[#allocation2 + $0x78] sm:$0xff]
    %v46 = vld [vmem:[%s2] sm:$0x1]
    %v48 = vlaneseq
    %v49 = vshrl.u32 %v48, 7
    %v50 = vsub.s32 0, %v49
    %v51 = vrot.slane %v46, %v50
    %53 = vmatprep.subr.mxu0 0.0
    %54 = vmatpush1.msra.mxu0 %v45
    %55 = vmatprep.subr.mxu0 0.0
    %56 = vmatpush1.msra.mxu0 %v44
    %57 = vmatprep.subr.mxu0 0.0
    %58 = vmatpush1.msra.mxu0 %v43
    %59 = vmatprep.subr.mxu0 0.0
    %60 = vmatpush1.msra.mxu0 %v42
    %61 = vmatprep.subr.mxu0 0.0
    %62 = vmatpush1.msra.mxu0 %v41
    %63 = vmatprep.subr.mxu0 0.0
    %64 = vmatpush1.msra.mxu0 %v40
    %65 = vmatprep.subr.mxu0 0.0
    %66 = vmatpush1.msra.mxu0 %v39
    %67 = vmatprep.subr.mxu0 0.0
    %68 = vmatpush1.msra.mxu0 %v38
    %69 = vmatprep.subr.mxu0 0.0
    %70 = vmatpush1.msra.mxu0 %v37
    %71 = vmatprep.subr.mxu0 0.0
    %72 = vmatpush1.msra.mxu0 %v36
    %73 = vmatprep.subr.mxu0 0.0
    %74 = vmatpush1.msra.mxu0 %v35
    %75 = vmatprep.subr.mxu0 0.0
    %76 = vmatpush1.msra.mxu0 %v34
    %77 = vmatprep.subr.mxu0 0.0
    %78 = vmatpush1.msra.mxu0 %v33
    %79 = vmatprep.subr.mxu0 0.0
    %80 = vmatpush1.msra.mxu0 %v32
    %81 = vmatprep.subr.mxu0 0.0
    %82 = vmatpush1.msra.mxu0 %v31
    %83 = vmatprep.subr.mxu0 0.0
    %84 = vmatpush1.msra.mxu0 %v30
    %85 = vmatprep.subr.mxu0 0.0
    %86 = vmatpush2.msra.mxu0 0.0
    %87 = vmatprep.subr.mxu0 0.0
    %88 = vmatpush2.msra.mxu0 0.0
    %89 = vmatprep.subr.mxu0 0.0
    %90 = vmatpush2.msra.mxu0 0.0
    %91 = vmatprep.subr.mxu0 0.0
    %92 = vmatpush2.msra.mxu0 0.0
    %93 = vmatprep.subr.mxu0 0.0
    %94 = vmatpush2.msra.mxu0 0.0
    %95 = vmatprep.subr.mxu0 0.0
    %96 = vmatpush2.msra.mxu0 0.0
    %97 = vmatprep.subr.mxu0 0.0
    %98 = vmatpush2.msra.mxu0 0.0
    %99 = vmatprep.subr.mxu0 0.0
    %100 = vmatpush2.msra.mxu0 0.0
    %101 = vmatprep.subr.mxu0 0.0
    %102 = vmatpush2.msra.mxu0 0.0
    %103 = vmatprep.subr.mxu0 0.0
    %104 = vmatpush2.msra.mxu0 0.0
    %105 = vmatprep.subr.mxu0 0.0
    %106 = vmatpush2.msra.mxu0 0.0
    %107 = vmatprep.subr.mxu0 0.0
    %108 = vmatpush2.msra.mxu0 0.0
    %109 = vmatprep.subr.mxu0 0.0
    %110 = vmatpush2.msra.mxu0 0.0
    %111 = vmatprep.subr.mxu0 0.0
    %112 = vmatpush2.msra.mxu0 0.0
    %113 = vmatprep.subr.mxu0 0.0
    %114 = vmatpush2.msra.mxu0 0.0
    %115 = vmatprep.subr.mxu0 0.0
    %116 = vmatpush2.msra.mxu0 0.0
    %117 = vmatprep.mubr.f32.mxu0 0.0
    %118 = vmatmul.mubr.f32.gmra.mxu0 %v28
    %v119 = vpop.f32.mrf.mxu0
    %v120 = vadd.f32 %v51, %v119
    %v121 = vpop.f32.mrf.mxu0
    %122 = vmatprep.mubr.f32.mxu0 0.0
    %123 = vmatmul.mubr.f32.gmra.mxu0 %v29
    %v124 = vpop.f32.mrf.mxu0
    %v125 = vadd.f32 %v51, %v124
    %v126 = vpop.f32.mrf.mxu0
    %127 = vdwg.mxu0
    %128 = vst [vmem:[%s3] sm:$0xff] %v120
    %129 = vst [vmem:[%s3 + $0x8] sm:$0xff] %v125
    // Predicated region
    $region18: #{semantic_decoder_avvp_forward.1} parent=1 // pred_check
      _
    $region19: #{semantic_decoder_avvp_forward.1} parent=1 // pred_check_branch
      %131 = sbr.rel (0) target = $region21
    $region20: #{semantic_decoder_avvp_forward.1} parent=1 // pred_region
      _
    $region21: #{semantic_decoder_avvp_forward.1} parent=1 // pred_fallthru
      _
    // Predicated region
    $region22: #{semantic_decoder_avvp_forward.1} parent=1 // pred_check
      _
    $region23: #{semantic_decoder_avvp_forward.1} parent=1 // pred_check_branch
      %133 = sbr.rel (0) target = $region25
    $region24: #{semantic_decoder_avvp_forward.1} parent=1 // pred_region
      _
    $region25: #{semantic_decoder_avvp_forward.1} parent=1 // pred_fallthru
      _
    %134 = vsyncpa [#allocation3], 1

</llo_original>
